<compile_context>
chip_gen: v7x
topology: tpu7x:2x2x1
jax: 0.10.0
libtpu: 0.0.40
codegen_flags: <defaults>
</compile_context>

<pallas_src>
import jax
import jax.numpy as jnp
from jax.experimental import pallas as pl
from jax.experimental.pallas import tpu as pltpu


def _round_up(x, m):
    return (x + m - 1) // m * m


def _vmem_budget():
    """Per-generation (scoped_vmem_limit, per-tile f32 byte budget)."""
    cap = 64 * 1024 * 1024  # conservative fallback (v7x per-TC physical VMEM)
    try:
        info = pltpu.get_tpu_info()
        cap = int(getattr(info, "vmem_capacity_bytes", cap)) or cap
    except Exception:
        pass
    vmem_limit = min(cap // 2, 64 * 1024 * 1024)
    # Double-buffered input tile + ~2 tile-sized f32 VPU temporaries must fit
    # comfortably below the scoped limit -> ~1/5 of the limit per f32 tile.
    tile_budget = vmem_limit // 5
    return vmem_limit, tile_budget


def _choose_batch_tile(B, H, tile_budget_bytes):
    """Largest sublane-aligned batch tile fitting the per-tile f32 budget."""
    # The in-kernel temporaries are f32 regardless of input dtype -> budget in f32.
    max_tb = max((tile_budget_bytes // (H * 4)) // 8 * 8, 8)
    # TODO(synk): for very large H even tb=8 can exceed the budget; if that ever
    # matters, split H onto a second "arbitrary" grid axis with an f32 accumulator.
    if B <= max_tb:
        if B >= 256:
            # v7x megacore: emit >= 2 grid tiles so the "parallel" batch axis
            # shards across both TensorCores (no effect on single-TC v5e/v6e).
            return min(max_tb, _round_up(pl.cdiv(B, 2), 8))
        return B
    return max_tb


def _normal_decoder_kernel(h_ref, w_ref, b_ref, o_ref):
    # h_ref: [TB, H] (input dtype, VMEM, streamed / double-buffered)
    # w_ref: [2, H]  f32  (VMEM, resident across grid steps)
    # b_ref: [2]     f32  (SMEM scalars)
    # o_ref: [TB, 2] (output dtype)
    h = h_ref[...].astype(jnp.float32)  # no-op for f32 inputs; exact f32 math
    w0 = w_ref[0:1, :]                  # [1, H]
    w1 = w_ref[1:2, :]                  # [1, H]
    # VPU multiply + lane reduce; rows are independent, so garbage rows in a
    # partial last block only affect output rows that get dropped on store.
    out0 = jnp.sum(h * w0, axis=-1, keepdims=True) + b_ref[0]  # [TB, 1]
    out1 = jnp.sum(h * w1, axis=-1, keepdims=True) + b_ref[1]  # [TB, 1]
    o_ref[:, 0:1] = out0.astype(o_ref.dtype)
    o_ref[:, 1:2] = out1.astype(o_ref.dtype)


def normal_decoder_forward(hidden, weight, bias, batch_size=None, tb=None):
    """Pallas equivalent of NormalDecoder.forward(hidden, batch_size).

    hidden: [B, n_hidden]  (f32 or bf16 -- streamed in its own dtype)
    weight: [2, n_hidden]  (PyTorch Linear weight layout; kept in f32)
    bias:   [2]
    Returns [B, 2] in hidden's dtype (f32 accumulation inside the kernel).
    """
    del batch_size  # unused in the PyTorch forward as well
    B, H = hidden.shape
    in_dtype = hidden.dtype
    itemsize = jnp.dtype(in_dtype).itemsize

    w = weight.astype(jnp.float32)  # tiny [2, H]; stays f32 for exactness
    b = bias.astype(jnp.float32)    # [2] -> SMEM scalars

    vmem_limit, tile_budget = _vmem_budget()
    if tb is None:
        tb = _choose_batch_tile(B, H, tile_budget)
    else:
        tb = min(int(tb), B)
        if tb < B:
            tb = max((tb // 8) * 8, 8)  # sublane alignment for partial tiles

    n_tiles = pl.cdiv(B, tb)

    cost = pl.CostEstimate(
        flops=4 * B * H,
        transcendentals=0,
        bytes_accessed=B * H * itemsize + 2 * H * 4 + 2 * 4 + B * 2 * itemsize,
    )

    out = pl.pallas_call(
        _normal_decoder_kernel,
        out_shape=jax.ShapeDtypeStruct((B, 2), in_dtype),
        grid_spec=pltpu.PrefetchScalarGridSpec(
            num_scalar_prefetch=0,
            grid=(n_tiles,),
            in_specs=[
                pl.BlockSpec((tb, H), lambda i: (i, 0)),   # hidden: streamed
                pl.BlockSpec((2, H), lambda i: (0, 0)),    # weight: resident
                pl.BlockSpec(memory_space=pltpu.MemorySpace.SMEM),  # bias scalars
            ],
            out_specs=pl.BlockSpec((tb, 2), lambda i: (i, 0)),
        ),
        compiler_params=pltpu.CompilerParams(
            dimension_semantics=("parallel",),
            vmem_limit_bytes=vmem_limit,
        ),
        cost_estimate=cost,
    )(hidden, w, b)
    return out


def init_normal_decoder_params(key, n_hidden):
    """Deterministic init mimicking PyTorch Linear default (uniform +-1/sqrt(fan_in))."""
    k_w, k_b = jax.random.split(key)
    bound = 1.0 / (n_hidden ** 0.5)
    weight = jax.random.uniform(k_w, (2, n_hidden), jnp.float32, -bound, bound)
    bias = jax.random.uniform(k_b, (2,), jnp.float32, -bound, bound)
    return weight, bias


if __name__ == "__main__":
    key = jax.random.PRNGKey(0)
    k_in, k_params = jax.random.split(key)

    # Small demo shapes consistent with the module.
    batch = 8
    n_hidden = 32

    hidden = jax.random.normal(k_in, (batch, n_hidden), jnp.float32)
    weight, bias = init_normal_decoder_params(k_params, n_hidden)

    out = normal_decoder_forward(hidden, weight, bias, batch_size=batch)
    out = jax.block_until_ready(out)

    ref = hidden @ weight.T + bias
    assert out.shape == (batch, 2)
    assert jnp.allclose(out, ref, atol=1e-5, rtol=1e-5)

    # Ragged-B, multi-tile path (no padding): default tiling splits B>=256 in two.
    big_b, big_h = 300, 256
    k1, k2 = jax.random.split(k_in)
    big_hidden = jax.random.normal(k1, (big_b, big_h), jnp.float32)
    big_w, big_bias = init_normal_decoder_params(k2, big_h)

    big_out = normal_decoder_forward(big_hidden, big_w, big_bias, batch_size=big_b)
    big_out = jax.block_until_ready(big_out)
    big_ref = big_hidden @ big_w.T + big_bias
    assert big_out.shape == (big_b, 2)
    assert jnp.allclose(big_out, big_ref, atol=1e-5, rtol=1e-5)

    # Explicit small tile -> 3 grid steps with a partial trailing block.
    big_out2 = normal_decoder_forward(big_hidden, big_w, big_bias,
                                      batch_size=big_b, tb=128)
    big_out2 = jax.block_until_ready(big_out2)
    assert jnp.allclose(big_out2, big_ref, atol=1e-5, rtol=1e-5)

    print("KERNEL_OK")
</pallas_src>

<mosaic_0001>
module attributes {stable_mosaic.version = 11 : i64} {
  func.func @_normal_decoder_kernel(%arg0: i32, %arg1: memref<8x32xf32, #tpu.memory_space<vmem>>, %arg2: memref<2x32xf32, #tpu.memory_space<vmem>>, %arg3: memref<2xf32, #tpu.memory_space<smem>>, %arg4: memref<8x2xf32, #tpu.memory_space<vmem>>) attributes {dimension_semantics = [#tpu.dimension_semantics<parallel>], iteration_bounds = array<i64: 1>, scalar_prefetch = 0 : i64, scratch_operands = 0 : i64, tpu.core_type = #tpu.core_type<tc>, window_params = [{transform_indices = @transform_0, window_bounds = array<i64: 8, 32>}, {pipeline_mode = #tpu.pipeline_mode<synchronous>, transform_indices = @transform_1, window_bounds = array<i64: 2, 32>}, {transform_indices = @transform_2, window_bounds = array<i64: 2>}, {transform_indices = @transform_3, window_bounds = array<i64: 8, 2>}]} {
    %c0 = arith.constant 0 : index
    %c0_0 = arith.constant 0 : index
    %0 = vector.load %arg1[%c0, %c0_0] : memref<8x32xf32, #tpu.memory_space<vmem>>, vector<8x32xf32>
    %c0_1 = arith.constant 0 : index
    %c0_2 = arith.constant 0 : index
    %1 = vector.load %arg2[%c0_1, %c0_2] : memref<2x32xf32, #tpu.memory_space<vmem>>, vector<1x32xf32>
    %c1 = arith.constant 1 : index
    %c0_3 = arith.constant 0 : index
    %2 = vector.load %arg2[%c1, %c0_3] : memref<2x32xf32, #tpu.memory_space<vmem>>, vector<1x32xf32>
    %3 = vector.broadcast %1 : vector<1x32xf32> to vector<8x32xf32>
    %4 = arith.mulf %0, %3 : vector<8x32xf32>
    %cst = arith.constant dense<0.000000e+00> : vector<8xf32>
    %5 = vector.multi_reduction <add>, %4, %cst [1] : vector<8x32xf32> to vector<8xf32>
    %6 = vector.shape_cast %5 : vector<8xf32> to vector<8x1xf32>
    %c0_4 = arith.constant 0 : index
    %7 = memref.load %arg3[%c0_4] : memref<2xf32, #tpu.memory_space<smem>>
    %8 = vector.broadcast %7 : f32 to vector<8x1xf32>
    %9 = arith.addf %6, %8 : vector<8x1xf32>
    %10 = vector.broadcast %2 : vector<1x32xf32> to vector<8x32xf32>
    %11 = arith.mulf %0, %10 : vector<8x32xf32>
    %cst_5 = arith.constant dense<0.000000e+00> : vector<8xf32>
    %12 = vector.multi_reduction <add>, %11, %cst_5 [1] : vector<8x32xf32> to vector<8xf32>
    %13 = vector.shape_cast %12 : vector<8xf32> to vector<8x1xf32>
    %c1_6 = arith.constant 1 : index
    %14 = memref.load %arg3[%c1_6] : memref<2xf32, #tpu.memory_space<smem>>
    %15 = vector.broadcast %14 : f32 to vector<8x1xf32>
    %16 = arith.addf %13, %15 : vector<8x1xf32>
    %c0_7 = arith.constant 0 : index
    %c0_8 = arith.constant 0 : index
    %17 = vector.load %arg4[%c0_7, %c0_8] : memref<8x2xf32, #tpu.memory_space<vmem>>, vector<8x1xf32>
    tpu.vector_store %arg4[%c0_7, %c0_8], %9 {strides = array<i32>} : memref<8x2xf32, #tpu.memory_space<vmem>>, vector<8x1xf32>,
    %c0_9 = arith.constant 0 : index
    %c1_10 = arith.constant 1 : index
    %18 = vector.load %arg4[%c0_9, %c1_10] : memref<8x2xf32, #tpu.memory_space<vmem>>, vector<8x1xf32>
    tpu.vector_store %arg4[%c0_9, %c1_10], %16 {strides = array<i32>} : memref<8x2xf32, #tpu.memory_space<vmem>>, vector<8x1xf32>,
    return
  }
  func.func @transform_0(%arg0: i32) -> (i32, i32) {
    %c0_i32 = arith.constant 0 : i32
    %c0_i32_0 = arith.constant 0 : i32
    return %arg0, %c0_i32 : i32, i32
  }
  func.func @transform_1(%arg0: i32) -> (i32, i32) {
    %c0_i32 = arith.constant 0 : i32
    %c0_i32_0 = arith.constant 0 : i32
    %c0_i32_1 = arith.constant 0 : i32
    return %c0_i32, %c0_i32_0 : i32, i32
  }
  func.func @transform_2(%arg0: i32) -> i32 {
    %c0_i32 = arith.constant 0 : i32
    %c0_i32_0 = arith.constant 0 : i32
    return %c0_i32 : i32
  }
  func.func @transform_3(%arg0: i32) -> (i32, i32) {
    %c0_i32 = arith.constant 0 : i32
    %c0_i32_0 = arith.constant 0 : i32
    return %arg0, %c0_i32 : i32, i32
  }
}

</mosaic_0001>

<llo_original>
// kernel: tpu_custom_call.1
$region0: #{tpu_custom_call.1}
  #allocation0 [shape = 'u32[]', space=smem, size = 0x4, offset = 0x4, fixed_abs, tag = 'smem constant byte address 0x4 - core index']
  #allocation1 [shape = 'u32[144,128]{1,0:T(1,128)}', space=vmem, size = 0x12000, scoped, tag = 'internal scratch']
  %s0 = inlined_call_operand.hbm [shape: f32[8,32], index: 0, kind: input, shape index: {}]
  %s1 = inlined_call_operand.vmem [shape: f32[2,32], index: 1, kind: input, shape index: {}]
  %s2 = inlined_call_operand.vmem [shape: f32[2], index: 2, kind: input, shape index: {}]
  %s3 = inlined_call_operand.vmem [shape: f32[8,2], index: 3, kind: output, shape index: {}]
  %s4 = sld [smem:[#allocation0]]
  $region30: #{tpu_custom_call.1} parent=0
    _
  %s6 = ssub.s32 1, %s4
  %s7 = scalar_select 0, %s6, %s4
  $region1: #{tpu_custom_call.1} parent=0
    #allocation2 [shape = 'u8[4096]{0}', space=vmem, size = 0x1000, scoped, tag = 'input window, operand 0, single buffered']
    #allocation3 [shape = 's32[1]{0}', space=sflag, size = 0x4, scoped, tag = 'scoped memory for tpu_custom_call.1']
    #allocation4 [shape = 's32[1]{0}', space=sflag, size = 0x4, scoped, tag = 'scoped memory for tpu_custom_call.1']
    #allocation5 [shape = 'u8[512]{0}', space=smem, size = 0x200, scoped, tag = 'input window, operand 2, single buffered']
    %8 = vsyncpa [#allocation3], 0
    %9 = vsyncpa [#allocation4], 0
    // Predicated region
    $region2: #{tpu_custom_call.1} parent=1 // pred_check
      _
    $region3: #{tpu_custom_call.1} parent=1 // pred_check_branch
      %11 = sbr.rel (0) target = $region5
    $region4: #{tpu_custom_call.1} parent=1 // pred_region
      %s13 = ssub.s32 128, 128
      %14 = vsyncadd [#allocation3], %s13
      %s16 = sshll.u32 [#allocation2], 4
      %s17 = int_to_ptr.vmem [resolvable:$true] %s16
      %19 = dma.hbm_to_vmem [thread:$0]  %s0, 128, %s17, [#allocation3]
    $region5: #{tpu_custom_call.1} parent=1 // pred_fallthru
      _
    // Predicated region
    $region6: #{tpu_custom_call.1} parent=1 // pred_check
      _
    $region7: #{tpu_custom_call.1} parent=1 // pred_check_branch
      %21 = sbr.rel (0) target = $region9
    $region8: #{tpu_custom_call.1} parent=1 // pred_region
      _
    $region9: #{tpu_custom_call.1} parent=1 // pred_fallthru
      _
    // Predicated region
    $region10: #{tpu_custom_call.1} parent=1 // pred_check
      _
    $region11: #{tpu_custom_call.1} parent=1 // pred_check_branch
      %23 = sbr.rel (0) target = $region13
    $region12: #{tpu_custom_call.1} parent=1 // pred_region
      %s25 = ssub.s32 16, 16
      %26 = vsyncadd [#allocation4], %s25
      %s28 = sshll.u32 %s2, 4
      %s29 = int_to_ptr.vmem [resolvable:$true] %s28
      %31 = dma.vmem_to_smem %s29, 16, [#allocation5], [#allocation4]
    $region13: #{tpu_custom_call.1} parent=1 // pred_fallthru
      _
    // Predicated region
    $region14: #{tpu_custom_call.1} parent=1 // pred_check
      _
    $region15: #{tpu_custom_call.1} parent=1 // pred_check_branch
      %33 = sbr.rel (0) target = $region17
    $region16: #{tpu_custom_call.1} parent=1 // pred_region
      %34 = dma.done [#allocation3], 128
    $region17: #{tpu_custom_call.1} parent=1 // pred_fallthru
      _
    // Predicated region
    $region18: #{tpu_custom_call.1} parent=1 // pred_check
      _
    $region19: #{tpu_custom_call.1} parent=1 // pred_check_branch
      %36 = sbr.rel (0) target = $region21
    $region20: #{tpu_custom_call.1} parent=1 // pred_region
      %37 = dma.done [#allocation4], 16
    $region21: #{tpu_custom_call.1} parent=1 // pred_fallthru
      _
    %38 = sfence
    %v39 = vld [vmem:[#allocation2] sm:$0xff]
    %v40 = vld [vmem:[%s1] sm:$0x1]
    %v41 = vld [vmem:[%s1 + $0x1] sm:$0x1]
    %v42 = vlaneseq
    %v43 = vshrl.u32 %v42, 7
    %v44 = vsub.s32 0, %v43
    %v45 = vrot.slane %v40, %v44
    %v46 = vmul.f32 %v39, %v45
    %vm47 = vcmask 261120
    %v48 = vsel %vm47, %v46, 0.0
    %49 = vadd.xlane.f32.xlu0 %v48
    %v50 = vpop.xlane.xlu0 %49
    %s51 = sld [smem:[#allocation5]]
    %v52 = vstv %s51
    %v53 = vadd.f32 %v50, %v52
    %v54 = vlaneseq
    %v55 = vshrl.u32 %v54, 7
    %v56 = vsub.s32 0, %v55
    %v57 = vrot.slane %v41, %v56
    %v58 = vmul.f32 %v39, %v57
    %v59 = vsel %vm47, %v58, 0.0
    %60 = vadd.xlane.f32.xlu0 %v59
    %v61 = vpop.xlane.xlu0 %60
    %s62 = sld [smem:[#allocation5 + $0x1]]
    %v63 = vstv %s62
    %v64 = vadd.f32 %v61, %v63
    %vm65 = vcmask 7168
    %66 = vst.msk [vmem:[%s3] sm:$0xff] %vm65, %v53
    %vm67 = vcmask 15368
    %68 = vst.msk [vmem:[%s3] sm:$0xff] %vm67, %v64
    // Predicated region
    $region22: #{tpu_custom_call.1} parent=1 // pred_check
      _
    $region23: #{tpu_custom_call.1} parent=1 // pred_check_branch
      %70 = sbr.rel (0) target = $region25
    $region24: #{tpu_custom_call.1} parent=1 // pred_region
      _
    $region25: #{tpu_custom_call.1} parent=1 // pred_fallthru
      _
    // Predicated region
    $region26: #{tpu_custom_call.1} parent=1 // pred_check
      _
    $region27: #{tpu_custom_call.1} parent=1 // pred_check_branch
      %72 = sbr.rel (0) target = $region29
    $region28: #{tpu_custom_call.1} parent=1 // pred_region
      _
    $region29: #{tpu_custom_call.1} parent=1 // pred_fallthru
      _
    %73 = vsyncpa [#allocation3], 1
    %74 = vsyncpa [#allocation4], 1

</llo_original>
